<compile_context>
chip_gen: v6e
topology: v6e:2x2x1
jax: 0.10.0
libtpu: 0.0.40
codegen_flags: <defaults>
</compile_context>

<pallas_src>
import jax
import jax.numpy as jnp
from jax import lax
from jax.experimental import pallas as pl
from jax.experimental.pallas import tpu as pltpu


LN_EPS = 1e-5                      # PyTorch nn.LayerNorm default


def _round_up(x, m):
    return ((x + m - 1) // m) * m


# ------------------------------ VMEM budgeting -------------------------------
_VMEM_BUDGET_CACHE = None


def _vmem_budget_bytes():
    """~75% of the chip's physical VMEM (per-TC), capped; cached."""
    global _VMEM_BUDGET_CACHE
    if _VMEM_BUDGET_CACHE is None:
        try:
            cap = int(pltpu.get_tpu_info().vmem_capacity_bytes)
        except Exception:
            cap = 64 << 20          # conservative fallback (v7x per-TC)
        if cap <= 0:
            cap = 64 << 20
        _VMEM_BUDGET_CACHE = max(32 << 20, min(cap * 3 // 4, 112 << 20))
    return _VMEM_BUDGET_CACHE


def _align_row_tile(tr):
    """MXU M-dim alignment: multiple of 256 when large, multiple of 8 always."""
    tr = int(tr)
    if tr >= 256:
        return (tr // 256) * 256
    return max(8, (tr // 8) * 8)


def _choose_h_tile(d, h, w_bytes, budget):
    """Largest TN (multiple of 128) whose double-buffered (D, TN) W tile uses
    at most ~1/3 of the VMEM budget."""
    hp128 = _round_up(h, 128)
    w_budget = budget // 3
    tn = (w_budget // max(2 * d * w_bytes, 1)) // 128 * 128
    tn = max(128, tn)
    return int(min(tn, hp128))


def _choose_row_tile_fused(r, d, tn, in_bytes, out_bytes, w_bytes, budget):
    """Largest row tile whose full VMEM footprint (streamed tiles, resident
    operands, LN fp32 temporaries, fp32 accumulator) fits the budget."""
    fixed = 2 * d * tn * w_bytes        # W tile (double-buffered by Pallas)
    fixed += 2 * 2 * d * 4              # gamma + beta (double-buffered)
    fixed += 2 * tn * 4                 # bias (double-buffered)
    avail = max(budget - fixed, 1 << 20)
    per_row = (2 * d * in_bytes         # x tile, double-buffered
               + 2 * tn * out_bytes     # out tile, double-buffered
               + 4 * d * 4              # LN fp32 temps (x_f32, centered, y, cast)
               + tn * 4)                # fp32 accumulator
    tr = avail // max(per_row, 1)
    tr = min(tr, 1024, _round_up(r, 8))
    return _align_row_tile(tr)


def _choose_row_tile_ln(r, d, io_bytes, budget):
    per_row = 2 * d * io_bytes * 2 + 4 * d * 4   # in+out double-buffered + temps
    tr = (budget - (2 * 2 * d * 4)) // max(per_row, 1)
    tr = min(tr, 1024, _round_up(r, 8))
    return _align_row_tile(tr)


# ----------------------- fused LayerNorm + Linear kernel ----------------------
def _prenorm_linear_kernel(x_ref, g_ref, b_ref, w_ref, bias_ref, o_ref):
    # x_ref: (TR, D); g/b: (1, D); w_ref: (D, TN) (bf16); bias: (1, TN); o: (TR, TN)
    x = x_ref[...].astype(jnp.float32)
    g = g_ref[...].astype(jnp.float32)
    b = b_ref[...].astype(jnp.float32)

    mean = jnp.mean(x, axis=-1, keepdims=True)
    centered = x - mean
    var = jnp.mean(centered * centered, axis=-1, keepdims=True)
    inv = lax.rsqrt(var + LN_EPS)
    y = centered * inv * g + b                  # normalized activations (fp32)

    # bf16 at the MXU boundary, fp32 accumulation.
    acc = jnp.dot(y.astype(w_ref.dtype), w_ref[...],
                  preferred_element_type=jnp.float32)
    acc = acc + bias_ref[...].astype(jnp.float32)
    o_ref[...] = acc.astype(o_ref.dtype)


class PallasLinear:
    """Linear(dim -> hidden).  When used as PreNorm.fn it is fused with the LN.

    Padding to a lane-dense multiple-of-128 output width and the bf16 cast of
    W are done ONCE here, not per forward call.
    """

    def __init__(self, w, b, mxu_dtype=jnp.bfloat16):
        d, h = w.shape
        self.in_features = d
        self.out_features = h
        budget = _vmem_budget_bytes()
        w_bytes = jnp.dtype(mxu_dtype).itemsize
        self.tn = _choose_h_tile(d, h, w_bytes, budget)
        hp = _round_up(h, self.tn)
        w = w.astype(mxu_dtype)
        b = b.astype(jnp.float32)
        if hp != h:
            w = jnp.pad(w, ((0, 0), (0, hp - h)))   # zero cols -> sliced off later
            b = jnp.pad(b, (0, hp - h))
        self.hp = hp
        self.w = w                    # (D, Hp)  mxu_dtype
        self.b = b.reshape(1, hp)     # (1, Hp)  fp32


def prenorm_linear_pallas(x2d, gamma, beta, lin: PallasLinear):
    """Fused LayerNorm(D) + Linear(D->H).  x2d: (R, D)."""
    r, d = x2d.shape
    tn, hp = lin.tn, lin.hp
    budget = _vmem_budget_bytes()
    io_bytes = jnp.dtype(x2d.dtype).itemsize
    tr = _choose_row_tile_fused(r, d, tn, io_bytes, io_bytes,
                                jnp.dtype(lin.w.dtype).itemsize, budget)

    g2 = gamma.reshape(1, d).astype(jnp.float32)
    b2 = beta.reshape(1, d).astype(jnp.float32)

    out = pl.pallas_call(
        _prenorm_linear_kernel,
        out_shape=jax.ShapeDtypeStruct((r, hp), x2d.dtype),
        grid=(pl.cdiv(r, tr), hp // tn),
        in_specs=[
            pl.BlockSpec((tr, d), lambda i, j: (i, 0)),    # x tile (streamed)
            pl.BlockSpec((1, d), lambda i, j: (0, 0)),     # gamma (resident)
            pl.BlockSpec((1, d), lambda i, j: (0, 0)),     # beta  (resident)
            pl.BlockSpec((d, tn), lambda i, j: (0, j)),    # W tile
            pl.BlockSpec((1, tn), lambda i, j: (0, j)),    # bias tile
        ],
        out_specs=pl.BlockSpec((tr, tn), lambda i, j: (i, j)),
        compiler_params=pltpu.CompilerParams(
            dimension_semantics=("parallel", "parallel"),
            vmem_limit_bytes=budget,
        ),
    )(x2d, g2, b2, lin.w, lin.b)

    if hp != lin.out_features:
        out = out[:, :lin.out_features]     # drop zero-weight pad columns
    return out


# -------------------- standalone (tiled) LayerNorm kernel --------------------
def _layernorm_kernel(x_ref, g_ref, b_ref, o_ref):
    x = x_ref[...].astype(jnp.float32)
    g = g_ref[...].astype(jnp.float32)
    b = b_ref[...].astype(jnp.float32)
    mean = jnp.mean(x, axis=-1, keepdims=True)
    centered = x - mean
    var = jnp.mean(centered * centered, axis=-1, keepdims=True)
    inv = lax.rsqrt(var + LN_EPS)
    o_ref[...] = (centered * inv * g + b).astype(o_ref.dtype)


def layernorm_pallas(x2d, gamma, beta):
    r, d = x2d.shape
    budget = _vmem_budget_bytes()
    tr = _choose_row_tile_ln(r, d, jnp.dtype(x2d.dtype).itemsize, budget)
    g2 = gamma.reshape(1, d).astype(jnp.float32)
    b2 = beta.reshape(1, d).astype(jnp.float32)
    return pl.pallas_call(
        _layernorm_kernel,
        out_shape=jax.ShapeDtypeStruct((r, d), x2d.dtype),
        grid=(pl.cdiv(r, tr),),
        in_specs=[
            pl.BlockSpec((tr, d), lambda i: (i, 0)),
            pl.BlockSpec((1, d), lambda i: (0, 0)),
            pl.BlockSpec((1, d), lambda i: (0, 0)),
        ],
        out_specs=pl.BlockSpec((tr, d), lambda i: (i, 0)),
        compiler_params=pltpu.CompilerParams(
            dimension_semantics=("parallel",),
            vmem_limit_bytes=budget,
        ),
    )(x2d, g2, b2)


# --------------------------------- PreNorm -----------------------------------
class PreNorm:
    """JAX/Pallas equivalent of:
         self.norm = nn.LayerNorm(dim); forward(x) = fn(norm(x), **kwargs)
    If fn is a PallasLinear, the LayerNorm and the Linear run as ONE fused
    kernel (normalized activations never round-trip through HBM).
    """

    def __init__(self, dim, fn, gamma=None, beta=None):
        self.dim = dim
        self.fn = fn
        self.gamma = jnp.ones((dim,), jnp.float32) if gamma is None else gamma
        self.beta = jnp.zeros((dim,), jnp.float32) if beta is None else beta

    def __call__(self, x, **kwargs):
        lead = x.shape[:-1]
        x2d = x.reshape((-1, self.dim))
        if isinstance(self.fn, PallasLinear):
            out2d = prenorm_linear_pallas(x2d, self.gamma, self.beta, self.fn)
            return out2d.reshape(lead + (out2d.shape[-1],))
        # Generic fn: run the tiled LN kernel, then the user fn (outside Pallas).
        y2d = layernorm_pallas(x2d, self.gamma, self.beta)
        return self.fn(y2d.reshape(lead + (self.dim,)), **kwargs)


# ------------------------------ reference (JAX) ------------------------------
def _ln_ref(x, gamma, beta):
    mean = jnp.mean(x, axis=-1, keepdims=True)
    var = jnp.mean((x - mean) ** 2, axis=-1, keepdims=True)
    return (x - mean) / jnp.sqrt(var + LN_EPS) * gamma + beta


def _prenorm_linear_ref(x, gamma, beta, w, b):
    return jnp.einsum("bnd,dh->bnh", _ln_ref(x, gamma, beta), w) + b


if __name__ == "__main__":
    key = jax.random.PRNGKey(0)
    B, N, D, H = 2, 8, 32, 64  # small shapes: batch, seq, dim, hidden

    k_x, k_g, k_b, k_w, k_bias = jax.random.split(key, 5)
    x = jax.random.normal(k_x, (B, N, D), dtype=jnp.float32)

    gamma = 1.0 + 0.1 * jax.random.normal(k_g, (D,), dtype=jnp.float32)
    beta = 0.1 * jax.random.normal(k_b, (D,), dtype=jnp.float32)
    w = jax.random.normal(k_w, (D, H), dtype=jnp.float32) / jnp.sqrt(D)
    bias = 0.1 * jax.random.normal(k_bias, (H,), dtype=jnp.float32)

    # fn = Linear(dim -> hidden); PreNorm fuses it with the LayerNorm.
    prenorm = PreNorm(D, PallasLinear(w, bias), gamma, beta)
    out = jax.block_until_ready(prenorm(x))
    ref = jax.block_until_ready(_prenorm_linear_ref(x, gamma, beta, w, bias))

    assert out.shape == (B, N, H), out.shape
    # Looser tolerance: the matmul runs in bf16 on the MXU (fp32 accumulation).
    assert jnp.allclose(out, ref, atol=3e-2, rtol=3e-2), float(
        jnp.max(jnp.abs(out - ref))
    )

    # Generic (non-fused) path: PreNorm with an arbitrary fn (fp32 end-to-end).
    prenorm_generic = PreNorm(D, lambda y: y * 2.0, gamma, beta)
    out2 = jax.block_until_ready(prenorm_generic(x))
    ref2 = _ln_ref(x, gamma, beta) * 2.0
    assert out2.shape == x.shape, out2.shape
    assert jnp.allclose(out2, ref2, atol=1e-4, rtol=1e-4), float(
        jnp.max(jnp.abs(out2 - ref2))
    )

    print("KERNEL_OK")
</pallas_src>

<mosaic_0001>
module attributes {stable_mosaic.version = 11 : i64} {
  func.func @_prenorm_linear_kernel(%arg0: i32, %arg1: i32, %arg2: memref<16x32xf32, #tpu.memory_space<vmem>>, %arg3: memref<1x32xf32, #tpu.memory_space<vmem>>, %arg4: memref<1x32xf32, #tpu.memory_space<vmem>>, %arg5: memref<32x128xbf16, #tpu.memory_space<vmem>>, %arg6: memref<1x128xf32, #tpu.memory_space<vmem>>, %arg7: memref<16x128xf32, #tpu.memory_space<vmem>>) attributes {dimension_semantics = [#tpu.dimension_semantics<parallel>, #tpu.dimension_semantics<parallel>], iteration_bounds = array<i64: 1, 1>, scalar_prefetch = 0 : i64, scratch_operands = 0 : i64, tpu.core_type = #tpu.core_type<tc>, window_params = [{transform_indices = @transform_0, window_bounds = array<i64: 16, 32>}, {pipeline_mode = #tpu.pipeline_mode<synchronous>, transform_indices = @transform_1, window_bounds = array<i64: 1, 32>}, {pipeline_mode = #tpu.pipeline_mode<synchronous>, transform_indices = @transform_2, window_bounds = array<i64: 1, 32>}, {transform_indices = @transform_3, window_bounds = array<i64: 32, 128>}, {transform_indices = @transform_4, window_bounds = array<i64: 1, 128>}, {transform_indices = @transform_5, window_bounds = array<i64: 16, 128>}]} {
    %c0 = arith.constant 0 : index
    %c0_0 = arith.constant 0 : index
    %0 = vector.load %arg2[%c0, %c0_0] : memref<16x32xf32, #tpu.memory_space<vmem>>, vector<16x32xf32>
    %c0_1 = arith.constant 0 : index
    %c0_2 = arith.constant 0 : index
    %1 = vector.load %arg3[%c0_1, %c0_2] : memref<1x32xf32, #tpu.memory_space<vmem>>, vector<1x32xf32>
    %c0_3 = arith.constant 0 : index
    %c0_4 = arith.constant 0 : index
    %2 = vector.load %arg4[%c0_3, %c0_4] : memref<1x32xf32, #tpu.memory_space<vmem>>, vector<1x32xf32>
    %cst = arith.constant dense<0.000000e+00> : vector<16xf32>
    %3 = vector.multi_reduction <add>, %0, %cst [1] : vector<16x32xf32> to vector<16xf32>
    %4 = vector.shape_cast %3 : vector<16xf32> to vector<16x1xf32>
    %cst_5 = arith.constant 3.200000e+01 : f32
    %5 = vector.broadcast %cst_5 : f32 to vector<16x1xf32>
    %6 = arith.divf %4, %5 : vector<16x1xf32>
    %7 = vector.broadcast %6 : vector<16x1xf32> to vector<16x32xf32>
    %8 = arith.subf %0, %7 : vector<16x32xf32>
    %9 = arith.mulf %8, %8 : vector<16x32xf32>
    %cst_6 = arith.constant dense<0.000000e+00> : vector<16xf32>
    %10 = vector.multi_reduction <add>, %9, %cst_6 [1] : vector<16x32xf32> to vector<16xf32>
    %11 = vector.shape_cast %10 : vector<16xf32> to vector<16x1xf32>
    %cst_7 = arith.constant 3.200000e+01 : f32
    %12 = vector.broadcast %cst_7 : f32 to vector<16x1xf32>
    %13 = arith.divf %11, %12 : vector<16x1xf32>
    %cst_8 = arith.constant 9.99999974E-6 : f32
    %14 = vector.broadcast %cst_8 : f32 to vector<16x1xf32>
    %15 = arith.addf %13, %14 : vector<16x1xf32>
    %16 = math.rsqrt %15 : vector<16x1xf32>
    %17 = vector.broadcast %16 : vector<16x1xf32> to vector<16x32xf32>
    %18 = arith.mulf %8, %17 : vector<16x32xf32>
    %19 = vector.broadcast %1 : vector<1x32xf32> to vector<16x32xf32>
    %20 = arith.mulf %18, %19 : vector<16x32xf32>
    %21 = vector.broadcast %2 : vector<1x32xf32> to vector<16x32xf32>
    %22 = arith.addf %20, %21 : vector<16x32xf32>
    %23 = arith.truncf %22 : vector<16x32xf32> to vector<16x32xbf16>
    %c0_9 = arith.constant 0 : index
    %c0_10 = arith.constant 0 : index
    %24 = vector.load %arg5[%c0_9, %c0_10] : memref<32x128xbf16, #tpu.memory_space<vmem>>, vector<32x128xbf16>
    %cst_11 = arith.constant dense<0.000000e+00> : vector<16x128xf32>
    %25 = tpu.matmul %23, %24, %cst_11 {dimension_numbers = #tpu.dot_dimension_numbers<[1], [0], [0], [1], [0, 0, 1, 1], [], []>} : vector<16x32xbf16>, vector<32x128xbf16>, vector<16x128xf32> -> vector<16x128xf32>
    %c0_12 = arith.constant 0 : index
    %c0_13 = arith.constant 0 : index
    %26 = vector.load %arg6[%c0_12, %c0_13] : memref<1x128xf32, #tpu.memory_space<vmem>>, vector<1x128xf32>
    %27 = vector.broadcast %26 : vector<1x128xf32> to vector<16x128xf32>
    %28 = arith.addf %25, %27 : vector<16x128xf32>
    %c0_14 = arith.constant 0 : index
    %c0_15 = arith.constant 0 : index
    %29 = vector.load %arg7[%c0_14, %c0_15] : memref<16x128xf32, #tpu.memory_space<vmem>>, vector<16x128xf32>
    tpu.vector_store %arg7[%c0_14, %c0_15], %28 {strides = array<i32>} : memref<16x128xf32, #tpu.memory_space<vmem>>, vector<16x128xf32>,
    return
  }
  func.func @transform_0(%arg0: i32, %arg1: i32) -> (i32, i32) {
    %c0_i32 = arith.constant 0 : i32
    %c0_i32_0 = arith.constant 0 : i32
    return %arg0, %c0_i32 : i32, i32
  }
  func.func @transform_1(%arg0: i32, %arg1: i32) -> (i32, i32) {
    %c0_i32 = arith.constant 0 : i32
    %c0_i32_0 = arith.constant 0 : i32
    %c0_i32_1 = arith.constant 0 : i32
    return %c0_i32, %c0_i32_0 : i32, i32
  }
  func.func @transform_2(%arg0: i32, %arg1: i32) -> (i32, i32) {
    %c0_i32 = arith.constant 0 : i32
    %c0_i32_0 = arith.constant 0 : i32
    %c0_i32_1 = arith.constant 0 : i32
    return %c0_i32, %c0_i32_0 : i32, i32
  }
  func.func @transform_3(%arg0: i32, %arg1: i32) -> (i32, i32) {
    %c0_i32 = arith.constant 0 : i32
    %c0_i32_0 = arith.constant 0 : i32
    return %c0_i32, %arg1 : i32, i32
  }
  func.func @transform_4(%arg0: i32, %arg1: i32) -> (i32, i32) {
    %c0_i32 = arith.constant 0 : i32
    %c0_i32_0 = arith.constant 0 : i32
    return %c0_i32, %arg1 : i32, i32
  }
  func.func @transform_5(%arg0: i32, %arg1: i32) -> (i32, i32) {
    %c0_i32 = arith.constant 0 : i32
    return %arg0, %arg1 : i32, i32
  }
}

</mosaic_0001>

<llo_original>
// kernel: tpu_custom_call.1
$region0: #{tpu_custom_call.1}
  #allocation0 [shape = 'u32[]', space=smem, size = 0x4, offset = 0x4, fixed_abs, tag = 'smem constant byte address 0x4 - core index']
  #allocation1 [shape = 'u32[144,128]{1,0:T(1,128)}', space=vmem, size = 0x12000, scoped, tag = 'internal scratch']
  %s0 = inlined_call_operand.hbm [shape: f32[16,32], index: 0, kind: input, shape index: {}]
  %s1 = inlined_call_operand.vmem [shape: f32[1,32], index: 1, kind: input, shape index: {}]
  %s2 = inlined_call_operand.vmem [shape: f32[1,32], index: 2, kind: input, shape index: {}]
  %s3 = inlined_call_operand.hbm [shape: bf16[32,128], index: 3, kind: input, shape index: {}]
  %s4 = inlined_call_operand.vmem [shape: f32[1,128], index: 4, kind: input, shape index: {}]
  %s5 = inlined_call_operand.hbm [shape: f32[16,128], index: 5, kind: output, shape index: {}]
  %s6 = sld [smem:[#allocation0]]
  $region38: #{tpu_custom_call.1} parent=0
    _
  %s8 = ssub.s32 1, %s6
  %s9 = scalar_select 0, %s8, %s6
  $region1: #{tpu_custom_call.1} parent=0
    #allocation2 [shape = 'u8[8192]{0}', space=vmem, size = 0x2000, scoped, tag = 'input window, operand 0, single buffered']
    #allocation3 [shape = 's32[1]{0}', space=sflag, size = 0x4, scoped, tag = 'scoped memory for tpu_custom_call.1']
    #allocation4 [shape = 's32[1]{0}', space=sflag, size = 0x4, scoped, tag = 'scoped memory for tpu_custom_call.1']
    #allocation5 [shape = 'u8[8192]{0}', space=vmem, size = 0x2000, scoped, tag = 'input window, operand 3, single buffered']
    #allocation6 [shape = 's32[1]{0}', space=sflag, size = 0x4, scoped, tag = 'scoped memory for tpu_custom_call.1']
    #allocation7 [shape = 'u8[8192]{0}', space=vmem, size = 0x2000, scoped, tag = 'output window, operand 0, single buffered']
    %10 = vsyncpa [#allocation3], 0
    %11 = vsyncpa [#allocation6], 0
    %12 = vsyncpa [#allocation4], 0
    // Predicated region
    $region2: #{tpu_custom_call.1} parent=1 // pred_check
      _
    $region3: #{tpu_custom_call.1} parent=1 // pred_check_branch
      %14 = sbr.rel (0) target = $region5
    $region4: #{tpu_custom_call.1} parent=1 // pred_region
      %s16 = ssub.s32 256, 256
      %17 = vsyncadd [#allocation3], %s16
      %s18 = sshll.u32 [#allocation2], 4
      %s19 = int_to_ptr.vmem [resolvable:$true] %s18
      %24 = dma.hbm_to_vmem [thread:$0]  %s0, 256, %s19, [#allocation3], 128, 128, 8
    $region5: #{tpu_custom_call.1} parent=1 // pred_fallthru
      _
    // Predicated region
    $region6: #{tpu_custom_call.1} parent=1 // pred_check
      _
    $region7: #{tpu_custom_call.1} parent=1 // pred_check_branch
      %26 = sbr.rel (0) target = $region9
    $region8: #{tpu_custom_call.1} parent=1 // pred_region
      _
    $region9: #{tpu_custom_call.1} parent=1 // pred_fallthru
      _
    // Predicated region
    $region10: #{tpu_custom_call.1} parent=1 // pred_check
      _
    $region11: #{tpu_custom_call.1} parent=1 // pred_check_branch
      %28 = sbr.rel (0) target = $region13
    $region12: #{tpu_custom_call.1} parent=1 // pred_region
      _
    $region13: #{tpu_custom_call.1} parent=1 // pred_fallthru
      _
    // Predicated region
    $region14: #{tpu_custom_call.1} parent=1 // pred_check
      _
    $region15: #{tpu_custom_call.1} parent=1 // pred_check_branch
      %30 = sbr.rel (0) target = $region17
    $region16: #{tpu_custom_call.1} parent=1 // pred_region
      %s32 = ssub.s32 256, 256
      %33 = vsyncadd [#allocation6], %s32
      %s34 = sshll.u32 [#allocation5], 4
      %s35 = int_to_ptr.vmem [resolvable:$true] %s34
      %40 = dma.hbm_to_vmem [thread:$0]  %s3, 256, %s35, [#allocation6], 64, 64, 4
    $region17: #{tpu_custom_call.1} parent=1 // pred_fallthru
      _
    // Predicated region
    $region18: #{tpu_custom_call.1} parent=1 // pred_check
      _
    $region19: #{tpu_custom_call.1} parent=1 // pred_check_branch
      %42 = sbr.rel (0) target = $region21
    $region20: #{tpu_custom_call.1} parent=1 // pred_region
      _
    $region21: #{tpu_custom_call.1} parent=1 // pred_fallthru
      _
    // Predicated region
    $region22: #{tpu_custom_call.1} parent=1 // pred_check
      _
    $region23: #{tpu_custom_call.1} parent=1 // pred_check_branch
      %44 = sbr.rel (0) target = $region25
    $region24: #{tpu_custom_call.1} parent=1 // pred_region
      %45 = dma.done [#allocation3], 256
    $region25: #{tpu_custom_call.1} parent=1 // pred_fallthru
      _
    // Predicated region
    $region26: #{tpu_custom_call.1} parent=1 // pred_check
      _
    $region27: #{tpu_custom_call.1} parent=1 // pred_check_branch
      %47 = sbr.rel (0) target = $region29
    $region28: #{tpu_custom_call.1} parent=1 // pred_region
      %48 = dma.done [#allocation6], 256
    $region29: #{tpu_custom_call.1} parent=1 // pred_fallthru
      _
    %v50 = vld [vmem:[#allocation2] sm:$0xff]
    %v51 = vld [vmem:[#allocation2 + $0x8] sm:$0xff]
    %v52 = vld [vmem:[%s1] sm:$0x1]
    %v53 = vld [vmem:[%s2] sm:$0x1]
    %vm54 = vcmask 261120
    %v55 = vsel %vm54, %v50, 0.0
    %56 = vadd.xlane.f32.xlu0 %v55
    %v57 = vpop.xlane.xlu0 %56
    %v58 = vsel %vm54, %v51, 0.0
    %59 = vadd.xlane.f32.xlu0 %v58
    %v60 = vpop.xlane.xlu0 %59
    %v61 = vrcp.pop 32.0
    %v62 = vmul.f32 %v57, %v61
    %v63 = vmul.f32 %v60, %v61
    %v64 = vsub.f32 %v50, %v62
    %v65 = vsub.f32 %v51, %v63
    %v66 = vmul.f32 %v64, %v64
    %v67 = vmul.f32 %v65, %v65
    %v68 = vsel %vm54, %v66, 0.0
    %69 = vadd.xlane.f32.xlu0 %v68
    %v70 = vpop.xlane.xlu0 %69
    %v71 = vsel %vm54, %v67, 0.0
    %72 = vadd.xlane.f32.xlu0 %v71
    %v73 = vpop.xlane.xlu0 %72
    %v74 = vmul.f32 %v70, %v61
    %v75 = vmul.f32 %v73, %v61
    %v76 = vadd.f32 %v74, 1e-05
    %v77 = vadd.f32 %v75, 1e-05
    %v78 = vrsqrt.pop %v76
    %v79 = vrsqrt.pop %v77
    %v80 = vmul.f32 %v64, %v78
    %v81 = vmul.f32 %v65, %v79
    %v83 = vlaneseq
    %v84 = vshrl.u32 %v83, 7
    %v85 = vsub.s32 0, %v84
    %v86 = vrot.slane %v52, %v85
    %v88 = vmul.f32 %v80, %v86
    %v89 = vmul.f32 %v81, %v86
    %v91 = vlaneseq
    %v92 = vshrl.u32 %v91, 7
    %v93 = vsub.s32 0, %v92
    %v94 = vrot.slane %v53, %v93
    %v96 = vadd.f32 %v88, %v94
    %v97 = vadd.f32 %v89, %v94
    %v98 = vpack.c.bf16 %v97, %v96
    %v99 = vld [vmem:[#allocation5] sm:$0xf]
    %v100 = vld [vmem:[#allocation5 + $0x4] sm:$0xf]
    %v101 = vld [vmem:[#allocation5 + $0x8] sm:$0xf]
    %v102 = vld [vmem:[#allocation5 + $0xc] sm:$0xf]
    %v103 = vld [vmem:[%s4] sm:$0x1]
    %v105 = vlaneseq
    %v106 = vshrl.u32 %v105, 7
    %v107 = vsub.s32 0, %v106
    %v108 = vrot.slane %v103, %v107
    %v114 = vunpack.c.l.b16 %v99
    %v115 = vunpack.c.l.b16 %v100
    %v116 = vunpack.c.l.b16 %v101
    %v117 = vunpack.c.l.b16 %v102
    %v118 = vpack.c.b16 %v115, %v114
    %v119 = vpack.c.b16 %v117, %v116
    %v123 = vsel %vm54, %v98, 0
    %125 = vmatprep.subr.bf16.mxu0 0
    %126 = vmatpush1.bf16.msra.mxu0 0
    %127 = vmatprep.subr.bf16.mxu0 0
    %128 = vmatpush1.bf16.msra.mxu0 0
    %129 = vmatprep.subr.bf16.mxu0 0
    %130 = vmatpush1.bf16.msra.mxu0 0
    %131 = vmatprep.subr.bf16.mxu0 0
    %132 = vmatpush1.bf16.msra.mxu0 0
    %133 = vmatprep.subr.bf16.mxu0 0
    %134 = vmatpush1.bf16.msra.mxu0 0
    %135 = vmatprep.subr.bf16.mxu0 0
    %136 = vmatpush1.bf16.msra.mxu0 0
    %137 = vmatprep.subr.bf16.mxu0 0
    %138 = vmatpush1.bf16.msra.mxu0 %v119
    %139 = vmatprep.subr.bf16.mxu0 0
    %140 = vmatpush1.bf16.msra.mxu0 %v118
    %141 = vmatprep.subr.bf16.mxu0 0
    %142 = vmatpush2.bf16.msra.mxu0 0
    %143 = vmatprep.subr.bf16.mxu0 0
    %144 = vmatpush2.bf16.msra.mxu0 0
    %145 = vmatprep.subr.bf16.mxu0 0
    %146 = vmatpush2.bf16.msra.mxu0 0
    %147 = vmatprep.subr.bf16.mxu0 0
    %148 = vmatpush2.bf16.msra.mxu0 0
    %149 = vmatprep.subr.bf16.mxu0 0
    %150 = vmatpush2.bf16.msra.mxu0 0
    %151 = vmatprep.subr.bf16.mxu0 0
    %152 = vmatpush2.bf16.msra.mxu0 0
    %153 = vmatprep.subr.bf16.mxu0 0
    %154 = vmatpush2.bf16.msra.mxu0 0
    %155 = vmatprep.subr.bf16.mxu0 0
    %156 = vmatpush2.bf16.msra.mxu0 0
    %157 = vmatprep.mubr.bf16.mxu0 0
    %158 = vmatmul.mubr.bf16.gmra.mxu0 %v123
    %v159 = vpop.f32.mrf.mxu0
    %v160 = vadd.f32 %v108, %v159
    %v161 = vpop.f32.mrf.mxu0
    %v162 = vpop.f32.mrf.mxu0
    %v163 = vadd.f32 %v108, %v162
    %v164 = vpop.f32.mrf.mxu0
    %165 = vdwg.mxu0
    %166 = vst [vmem:[#allocation7] sm:$0xff] %v160
    %167 = vst [vmem:[#allocation7 + $0x8] sm:$0xff] %v163
    // Predicated region
    $region30: #{tpu_custom_call.1} parent=1 // pred_check
      _
    $region31: #{tpu_custom_call.1} parent=1 // pred_check_branch
      %169 = sbr.rel (0) target = $region33
    $region32: #{tpu_custom_call.1} parent=1 // pred_region
      %s171 = ssub.s32 256, 256
      %172 = vsyncadd [#allocation4], %s171
      %s173 = sshll.u32 [#allocation7], 4
      %s174 = int_to_ptr.vmem [resolvable:$true] %s173
      %179 = dma.vmem_to_hbm [thread:$0]  %s174, 256, %s5, [#allocation4], 128, 128, 8
    $region33: #{tpu_custom_call.1} parent=1 // pred_fallthru
      _
    // Predicated region
    $region34: #{tpu_custom_call.1} parent=1 // pred_check
      _
    $region35: #{tpu_custom_call.1} parent=1 // pred_check_branch
      %181 = sbr.rel (0) target = $region37
    $region36: #{tpu_custom_call.1} parent=1 // pred_region
      %182 = dma.done [#allocation4], 256
    $region37: #{tpu_custom_call.1} parent=1 // pred_fallthru
      _
    %183 = vsyncpa [#allocation3], 1
    %184 = vsyncpa [#allocation6], 1
    %185 = vsyncpa [#allocation4], 1

</llo_original>
